<compile_context>
chip_gen: v7x
topology: tpu7x:2x2x1
jax: 0.10.0
libtpu: 0.0.40
codegen_flags: <defaults>
</compile_context>

<pallas_src>
import functools

import jax
import jax.numpy as jnp
from jax.experimental import pallas as pl
from jax.experimental.pallas import tpu as pltpu

FC1_DIMS = 256
FC2_DIMS = 256
_LANE = 128
_SUBLANE = 8
_MAX_BLOCK_B = 1024   # review: 256-row tiles left 2-3x large-batch throughput on the table


def _round_up(x, m):
    return ((x + m - 1) // m) * m


def _default_epilogue_dtype():
    """bf16 bias+ReLU epilogues on chips with a native bf16 VPU (v6e/v7x);
    keep f32 on v5e and older (no bf16 VALU)."""
    try:
        kind = jax.devices()[0].device_kind.lower()
    except Exception:
        return jnp.float32
    return jnp.bfloat16 if ("v6" in kind or "v7" in kind) else jnp.float32


def _select_block_b(B):
    """Batch-tile choice: one tile for small batches (per-grid-step overhead
    dominates this tiny-weight MLP); otherwise tiles of up to 1024 rows with at
    least two grid steps so the 'parallel' batch axis can shard across both
    TensorCores on v7x."""
    if B <= 512:
        return _round_up(B, _SUBLANE)
    return min(_MAX_BLOCK_B, _round_up((B + 1) // 2, _LANE))


def prepare_params(params, *, epilogue_dtype=None):
    """One-time parameter prep (hoisted off the per-step forward path):
      * w1/w2 cast to bf16 for the MXU; w1 zero-padded along input_dims to a
        multiple of 128,
      * b1/b2 cast to the epilogue dtype,
      * the degenerate (256, 1) head stored as a (1, 256) f32 row (VPU/XLU
        path keeps the N=1 matmul off the MXU),
      * b3 as a (1, 1) f32 scalar destined for SMEM.
    Weights are stored (in, out), i.e. the transpose of PyTorch's (out, in).
    """
    if epilogue_dtype is None:
        epilogue_dtype = _default_epilogue_dtype()
    w1 = jnp.asarray(params["w1"])
    w2 = jnp.asarray(params["w2"])
    d, fc1 = w1.shape
    fc2 = w2.shape[1]
    d_pad = _round_up(d, _LANE)
    w1 = w1.astype(jnp.bfloat16)
    if d_pad != d:
        w1 = jnp.pad(w1, ((0, d_pad - d), (0, 0)))
    return {
        "w1": w1,                                                          # (d_pad, fc1) bf16
        "b1": jnp.asarray(params["b1"]).reshape(1, fc1).astype(epilogue_dtype),
        "w2": w2.astype(jnp.bfloat16),                                     # (fc1, fc2) bf16
        "b2": jnp.asarray(params["b2"]).reshape(1, fc2).astype(epilogue_dtype),
        "w3": jnp.asarray(params["w3"]).reshape(1, fc2).astype(jnp.float32),
        "b3": jnp.asarray(params["b3"]).reshape(1, 1).astype(jnp.float32),
    }


def _critic_kernel(x_ref, w1_ref, b1_ref, w2_ref, b2_ref, w3_ref, b3_ref,
                   out_ref, *, lane_dense):
    epi = b1_ref.dtype   # bf16 on v6e/v7x, f32 on v5e

    # Layer 1: in-kernel f32->bf16 cast of the state tile (VPU op, hidden under
    # the MXU), then (tb, D) @ (D, 256) with f32 accumulation.
    x = x_ref[...].astype(jnp.bfloat16)
    h1 = jnp.dot(x, w1_ref[...], preferred_element_type=jnp.float32)
    h1 = jnp.maximum(h1.astype(epi) + b1_ref[...], 0.0)

    # Layer 2: (tb, 256) @ (256, 256), f32 accumulation, bias+ReLU in epi dtype.
    h2 = jnp.dot(h1.astype(jnp.bfloat16), w2_ref[...],
                 preferred_element_type=jnp.float32)
    h2 = jnp.maximum(h2.astype(epi) + b2_ref[...], 0.0)

    # Head: an N=1 matmul wastes the MXU -> VPU multiply + XLU lane reduction,
    # accumulated in f32 (value precision).
    v = jnp.sum(h2.astype(jnp.float32) * w3_ref[...], axis=-1, keepdims=True)
    v = v + b3_ref[0, 0]                                   # (tb, 1) f32

    if lane_dense:
        # Lane-dense store: one (1, tb) row per tile instead of tb/8 masked
        # vst.msk column stores; the small column->row relayout rides the XLU.
        out_ref[...] = v.reshape(1, -1).astype(out_ref.dtype)
    else:
        out_ref[...] = v.astype(out_ref.dtype)


def critic_forward(state, prepared, *, block_b=None, lane_dense=True):
    """Fused Pallas forward pass of CriticNetwork.

    state    : (B, input_dims) float32
    prepared : output of prepare_params (call once, reuse every step)
    returns  : (B, 1) float32
    """
    B, D = state.shape
    w1, b1, w2, b2, w3, b3 = (prepared[k] for k in ("w1", "b1", "w2", "b2", "w3", "b3"))
    d_pad, fc1 = w1.shape
    fc2 = w2.shape[1]
    if D > d_pad:
        raise ValueError(f"state input_dims={D} exceeds prepared w1 rows={d_pad}")

    if block_b is None:
        block_b = _select_block_b(B)
    block_b = _round_up(block_b, _SUBLANE)
    B_pad = _round_up(B, block_b)
    num_tiles = B_pad // block_b

    # Keep state f32 here (bf16 cast happens in-kernel).  Zero-pad the batch to
    # a tile multiple and input_dims to a lane multiple; padded rows are sliced
    # off after the call.
    x = jnp.asarray(state, jnp.float32)
    if B_pad != B or d_pad != D:
        x = jnp.pad(x, ((0, B_pad - B), (0, d_pad - D)))

    in_specs = [
        pl.BlockSpec((block_b, d_pad), lambda i: (i, 0)),      # state tile (f32)
        # Weights/biases: full-array blocks at index (0, 0) -> never re-DMA'd.
        # (v5e note: if the x-tile DMA becomes exposed at large tiles, bump only
        #  the state BlockSpec above to pipeline_mode=pl.Buffered(3).)
        pl.BlockSpec((d_pad, fc1), lambda i: (0, 0)),          # w1 (bf16)
        pl.BlockSpec((1, fc1), lambda i: (0, 0)),              # b1
        pl.BlockSpec((fc1, fc2), lambda i: (0, 0)),            # w2 (bf16)
        pl.BlockSpec((1, fc2), lambda i: (0, 0)),              # b2
        pl.BlockSpec((1, fc2), lambda i: (0, 0)),              # w3 row (f32)
        pl.BlockSpec(memory_space=pltpu.MemorySpace.SMEM),     # b3 scalar in SMEM
    ]
    if lane_dense:
        out_shape = jax.ShapeDtypeStruct((num_tiles, block_b), jnp.float32)
        out_specs = pl.BlockSpec((1, block_b), lambda i: (i, 0))
    else:
        out_shape = jax.ShapeDtypeStruct((B_pad, 1), jnp.float32)
        out_specs = pl.BlockSpec((block_b, 1), lambda i: (i, 0))

    # Tight VMEM budget: ~2x the real footprint (double-buffered x/out tiles,
    # replicated weights, intermediate headroom); no 32 MiB floor.
    vmem_est = (
        2 * block_b * d_pad * 4                       # x tile (f32), 2 buffers
        + 2 * block_b * 4                             # out tile, 2 buffers
        + 2 * (d_pad * fc1 + fc1 * fc2) * 2           # w1, w2 (bf16), 2 buffers
        + 2 * (fc1 + fc2) * b1.dtype.itemsize + 2 * (fc2 + 1) * 4
        + 5 * block_b * max(fc1, fc2) * 4             # h1/h2/dot temporaries headroom
    )
    vmem_limit = int(min(64 * 1024 * 1024, max(8 * 1024 * 1024, 2 * vmem_est)))

    flops = 2 * B_pad * (d_pad * fc1 + fc1 * fc2 + fc2)
    bytes_accessed = int(
        x.size * 4
        + sum(int(a.size) * a.dtype.itemsize for a in (w1, b1, w2, b2, w3, b3))
        + B_pad * 4)

    out = pl.pallas_call(
        functools.partial(_critic_kernel, lane_dense=lane_dense),
        out_shape=out_shape,
        grid_spec=pltpu.PrefetchScalarGridSpec(
            num_scalar_prefetch=0,
            grid=(num_tiles,),
            in_specs=in_specs,
            out_specs=out_specs,
        ),
        compiler_params=pltpu.CompilerParams(
            dimension_semantics=("parallel",),
            vmem_limit_bytes=vmem_limit,
        ),
        cost_estimate=pl.CostEstimate(
            flops=flops, transcendentals=0, bytes_accessed=bytes_accessed),
    )(x, w1, b1, w2, b2, w3, b3)

    if lane_dense:
        return out.reshape(B_pad, 1)[:B]
    return out[:B]


def _forward_auto(state, prepared, **kw):
    """Prefer the lane-dense kernel; fall back to the column-output variant on
    Mosaic versions that cannot lower the in-kernel column->row relayout."""
    try:
        return critic_forward(state, prepared, lane_dense=True, **kw)
    except Exception:  # pragma: no cover - portability fallback
        return critic_forward(state, prepared, lane_dense=False, **kw)


def init_params(key, input_dims, fc1_dims=FC1_DIMS, fc2_dims=FC2_DIMS):
    """Deterministic synthetic parameters matching the nn.Linear layers,
    stored as (in, out) so the kernel computes x @ W + b."""
    k1, k2, k3, k4, k5, k6 = jax.random.split(key, 6)
    w1 = jax.random.normal(k1, (input_dims, fc1_dims), jnp.float32) * 0.05
    b1 = jax.random.normal(k2, (1, fc1_dims), jnp.float32) * 0.05
    w2 = jax.random.normal(k3, (fc1_dims, fc2_dims), jnp.float32) * 0.05
    b2 = jax.random.normal(k4, (1, fc2_dims), jnp.float32) * 0.05
    w3 = jax.random.normal(k5, (fc2_dims, 1), jnp.float32) * 0.05
    b3 = jax.random.normal(k6, (1, 1), jnp.float32) * 0.05
    return {"w1": w1, "b1": b1, "w2": w2, "b2": b2, "w3": w3, "b3": b3}


def critic_forward_ref(state, p):
    h1 = jnp.maximum(state @ p["w1"] + p["b1"], 0.0)
    h2 = jnp.maximum(h1 @ p["w2"] + p["b2"], 0.0)
    return h2 @ p["w3"] + p["b3"]


if __name__ == "__main__":
    key = jax.random.PRNGKey(0)
    k_x, k_p, k_x2 = jax.random.split(key, 3)

    input_dims = 32
    params = init_params(k_p, input_dims)
    prepared = prepare_params(params)   # hoisted: casts/pads/reshapes run once

    # Small RL-style batch: single tile, grid=(1,).
    state = jax.random.normal(k_x, (8, input_dims), jnp.float32)
    value = jax.block_until_ready(_forward_auto(state, prepared))
    ref = jax.block_until_ready(critic_forward_ref(state, params))
    assert value.shape == (8, 1)
    assert jnp.allclose(value, ref, atol=3e-2, rtol=3e-2)

    # Larger non-tile-multiple batch: exercises batch padding + multi-tile grid.
    state_big = jax.random.normal(k_x2, (520, input_dims), jnp.float32)
    value_big = jax.block_until_ready(_forward_auto(state_big, prepared))
    ref_big = jax.block_until_ready(critic_forward_ref(state_big, params))
    assert value_big.shape == (520, 1)
    assert jnp.allclose(value_big, ref_big, atol=3e-2, rtol=3e-2)

    print("KERNEL_OK")
</pallas_src>

<mosaic_0001>
module attributes {stable_mosaic.version = 11 : i64} {
  func.func @_critic_kernel(%arg0: i32, %arg1: memref<8x128xf32, #tpu.memory_space<vmem>>, %arg2: memref<128x256xbf16, #tpu.memory_space<vmem>>, %arg3: memref<1x256xf32, #tpu.memory_space<vmem>>, %arg4: memref<256x256xbf16, #tpu.memory_space<vmem>>, %arg5: memref<1x256xf32, #tpu.memory_space<vmem>>, %arg6: memref<1x256xf32, #tpu.memory_space<vmem>>, %arg7: memref<1x1xf32, #tpu.memory_space<smem>>, %arg8: memref<1x8xf32, #tpu.memory_space<vmem>>) attributes {dimension_semantics = [#tpu.dimension_semantics<parallel>], iteration_bounds = array<i64: 1>, scalar_prefetch = 0 : i64, scratch_operands = 0 : i64, tpu.core_type = #tpu.core_type<tc>, window_params = [{transform_indices = @transform_0, window_bounds = array<i64: 8, 128>}, {pipeline_mode = #tpu.pipeline_mode<synchronous>, transform_indices = @transform_1, window_bounds = array<i64: 128, 256>}, {pipeline_mode = #tpu.pipeline_mode<synchronous>, transform_indices = @transform_2, window_bounds = array<i64: 1, 256>}, {pipeline_mode = #tpu.pipeline_mode<synchronous>, transform_indices = @transform_3, window_bounds = array<i64: 256, 256>}, {pipeline_mode = #tpu.pipeline_mode<synchronous>, transform_indices = @transform_4, window_bounds = array<i64: 1, 256>}, {pipeline_mode = #tpu.pipeline_mode<synchronous>, transform_indices = @transform_5, window_bounds = array<i64: 1, 256>}, {transform_indices = @transform_6, window_bounds = array<i64: 1, 1>}, {transform_indices = @transform_7, window_bounds = array<i64: 1, 8>}]} {
    %c0 = arith.constant 0 : index
    %c0_0 = arith.constant 0 : index
    %0 = vector.load %arg1[%c0, %c0_0] : memref<8x128xf32, #tpu.memory_space<vmem>>, vector<8x128xf32>
    %1 = arith.truncf %0 : vector<8x128xf32> to vector<8x128xbf16>
    %c0_1 = arith.constant 0 : index
    %c0_2 = arith.constant 0 : index
    %2 = vector.load %arg2[%c0_1, %c0_2] : memref<128x256xbf16, #tpu.memory_space<vmem>>, vector<128x256xbf16>
    %cst = arith.constant dense<0.000000e+00> : vector<8x256xf32>
    %3 = tpu.matmul %1, %2, %cst {dimension_numbers = #tpu.dot_dimension_numbers<[1], [0], [0], [1], [0, 0, 1, 1], [], []>} : vector<8x128xbf16>, vector<128x256xbf16>, vector<8x256xf32> -> vector<8x256xf32>
    %c0_3 = arith.constant 0 : index
    %c0_4 = arith.constant 0 : index
    %4 = vector.load %arg3[%c0_3, %c0_4] : memref<1x256xf32, #tpu.memory_space<vmem>>, vector<1x256xf32>
    %5 = vector.broadcast %4 : vector<1x256xf32> to vector<8x256xf32>
    %6 = arith.addf %3, %5 : vector<8x256xf32>
    %cst_5 = arith.constant 0.000000e+00 : f32
    %7 = vector.broadcast %cst_5 : f32 to vector<8x256xf32>
    %8 = arith.maximumf %6, %7 : vector<8x256xf32>
    %9 = arith.truncf %8 : vector<8x256xf32> to vector<8x256xbf16>
    %c0_6 = arith.constant 0 : index
    %c0_7 = arith.constant 0 : index
    %10 = vector.load %arg4[%c0_6, %c0_7] : memref<256x256xbf16, #tpu.memory_space<vmem>>, vector<256x256xbf16>
    %cst_8 = arith.constant dense<0.000000e+00> : vector<8x256xf32>
    %11 = tpu.matmul %9, %10, %cst_8 {dimension_numbers = #tpu.dot_dimension_numbers<[1], [0], [0], [1], [0, 0, 1, 1], [], []>} : vector<8x256xbf16>, vector<256x256xbf16>, vector<8x256xf32> -> vector<8x256xf32>
    %c0_9 = arith.constant 0 : index
    %c0_10 = arith.constant 0 : index
    %12 = vector.load %arg5[%c0_9, %c0_10] : memref<1x256xf32, #tpu.memory_space<vmem>>, vector<1x256xf32>
    %13 = vector.broadcast %12 : vector<1x256xf32> to vector<8x256xf32>
    %14 = arith.addf %11, %13 : vector<8x256xf32>
    %cst_11 = arith.constant 0.000000e+00 : f32
    %15 = vector.broadcast %cst_11 : f32 to vector<8x256xf32>
    %16 = arith.maximumf %14, %15 : vector<8x256xf32>
    %c0_12 = arith.constant 0 : index
    %c0_13 = arith.constant 0 : index
    %17 = vector.load %arg6[%c0_12, %c0_13] : memref<1x256xf32, #tpu.memory_space<vmem>>, vector<1x256xf32>
    %18 = vector.broadcast %17 : vector<1x256xf32> to vector<8x256xf32>
    %19 = arith.mulf %16, %18 : vector<8x256xf32>
    %cst_14 = arith.constant dense<0.000000e+00> : vector<8xf32>
    %20 = vector.multi_reduction <add>, %19, %cst_14 [1] : vector<8x256xf32> to vector<8xf32>
    %21 = vector.shape_cast %20 : vector<8xf32> to vector<8x1xf32>
    %c0_15 = arith.constant 0 : index
    %c0_16 = arith.constant 0 : index
    %22 = memref.load %arg7[%c0_15, %c0_16] : memref<1x1xf32, #tpu.memory_space<smem>>
    %23 = vector.broadcast %22 : f32 to vector<8x1xf32>
    %24 = arith.addf %21, %23 : vector<8x1xf32>
    %25 = vector.shape_cast %24 : vector<8x1xf32> to vector<1x8xf32>
    %c0_17 = arith.constant 0 : index
    %c0_18 = arith.constant 0 : index
    %26 = vector.load %arg8[%c0_17, %c0_18] : memref<1x8xf32, #tpu.memory_space<vmem>>, vector<1x8xf32>
    tpu.vector_store %arg8[%c0_17, %c0_18], %25 {strides = array<i32>} : memref<1x8xf32, #tpu.memory_space<vmem>>, vector<1x8xf32>,
    return
  }
  func.func @transform_0(%arg0: i32) -> (i32, i32) {
    %c0_i32 = arith.constant 0 : i32
    %c0_i32_0 = arith.constant 0 : i32
    return %arg0, %c0_i32 : i32, i32
  }
  func.func @transform_1(%arg0: i32) -> (i32, i32) {
    %c0_i32 = arith.constant 0 : i32
    %c0_i32_0 = arith.constant 0 : i32
    %c0_i32_1 = arith.constant 0 : i32
    return %c0_i32, %c0_i32_0 : i32, i32
  }
  func.func @transform_2(%arg0: i32) -> (i32, i32) {
    %c0_i32 = arith.constant 0 : i32
    %c0_i32_0 = arith.constant 0 : i32
    %c0_i32_1 = arith.constant 0 : i32
    return %c0_i32, %c0_i32_0 : i32, i32
  }
  func.func @transform_3(%arg0: i32) -> (i32, i32) {
    %c0_i32 = arith.constant 0 : i32
    %c0_i32_0 = arith.constant 0 : i32
    %c0_i32_1 = arith.constant 0 : i32
    return %c0_i32, %c0_i32_0 : i32, i32
  }
  func.func @transform_4(%arg0: i32) -> (i32, i32) {
    %c0_i32 = arith.constant 0 : i32
    %c0_i32_0 = arith.constant 0 : i32
    %c0_i32_1 = arith.constant 0 : i32
    return %c0_i32, %c0_i32_0 : i32, i32
  }
  func.func @transform_5(%arg0: i32) -> (i32, i32) {
    %c0_i32 = arith.constant 0 : i32
    %c0_i32_0 = arith.constant 0 : i32
    %c0_i32_1 = arith.constant 0 : i32
    return %c0_i32, %c0_i32_0 : i32, i32
  }
  func.func @transform_6(%arg0: i32) -> (i32, i32) {
    %c0_i32 = arith.constant 0 : i32
    %c0_i32_0 = arith.constant 0 : i32
    %c0_i32_1 = arith.constant 0 : i32
    return %c0_i32, %c0_i32_0 : i32, i32
  }
  func.func @transform_7(%arg0: i32) -> (i32, i32) {
    %c0_i32 = arith.constant 0 : i32
    %c0_i32_0 = arith.constant 0 : i32
    return %arg0, %c0_i32 : i32, i32
  }
}

module attributes {stable_mosaic.version = 11 : i64} {
  func.func @_critic_kernel(%arg0: i32, %arg1: memref<8x128xf32, #tpu.memory_space<vmem>>, %arg2: memref<128x256xbf16, #tpu.memory_space<vmem>>, %arg3: memref<1x256xf32, #tpu.memory_space<vmem>>, %arg4: memref<256x256xbf16, #tpu.memory_space<vmem>>, %arg5: memref<1x256xf32, #tpu.memory_space<vmem>>, %arg6: memref<1x256xf32, #tpu.memory_space<vmem>>, %arg7: memref<1x1xf32, #tpu.memory_space<smem>>, %arg8: memref<8x1xf32, #tpu.memory_space<vmem>>) attributes {dimension_semantics = [#tpu.dimension_semantics<parallel>], iteration_bounds = array<i64: 1>, scalar_prefetch = 0 : i64, scratch_operands = 0 : i64, tpu.core_type = #tpu.core_type<tc>, window_params = [{transform_indices = @transform_0, window_bounds = array<i64: 8, 128>}, {pipeline_mode = #tpu.pipeline_mode<synchronous>, transform_indices = @transform_1, window_bounds = array<i64: 128, 256>}, {pipeline_mode = #tpu.pipeline_mode<synchronous>, transform_indices = @transform_2, window_bounds = array<i64: 1, 256>}, {pipeline_mode = #tpu.pipeline_mode<synchronous>, transform_indices = @transform_3, window_bounds = array<i64: 256, 256>}, {pipeline_mode = #tpu.pipeline_mode<synchronous>, transform_indices = @transform_4, window_bounds = array<i64: 1, 256>}, {pipeline_mode = #tpu.pipeline_mode<synchronous>, transform_indices = @transform_5, window_bounds = array<i64: 1, 256>}, {transform_indices = @transform_6, window_bounds = array<i64: 1, 1>}, {transform_indices = @transform_7, window_bounds = array<i64: 8, 1>}]} {
    %c0 = arith.constant 0 : index
    %c0_0 = arith.constant 0 : index
    %0 = vector.load %arg1[%c0, %c0_0] : memref<8x128xf32, #tpu.memory_space<vmem>>, vector<8x128xf32>
    %1 = arith.truncf %0 : vector<8x128xf32> to vector<8x128xbf16>
    %c0_1 = arith.constant 0 : index
    %c0_2 = arith.constant 0 : index
    %2 = vector.load %arg2[%c0_1, %c0_2] : memref<128x256xbf16, #tpu.memory_space<vmem>>, vector<128x256xbf16>
    %cst = arith.constant dense<0.000000e+00> : vector<8x256xf32>
    %3 = tpu.matmul %1, %2, %cst {dimension_numbers = #tpu.dot_dimension_numbers<[1], [0], [0], [1], [0, 0, 1, 1], [], []>} : vector<8x128xbf16>, vector<128x256xbf16>, vector<8x256xf32> -> vector<8x256xf32>
    %c0_3 = arith.constant 0 : index
    %c0_4 = arith.constant 0 : index
    %4 = vector.load %arg3[%c0_3, %c0_4] : memref<1x256xf32, #tpu.memory_space<vmem>>, vector<1x256xf32>
    %5 = vector.broadcast %4 : vector<1x256xf32> to vector<8x256xf32>
    %6 = arith.addf %3, %5 : vector<8x256xf32>
    %cst_5 = arith.constant 0.000000e+00 : f32
    %7 = vector.broadcast %cst_5 : f32 to vector<8x256xf32>
    %8 = arith.maximumf %6, %7 : vector<8x256xf32>
    %9 = arith.truncf %8 : vector<8x256xf32> to vector<8x256xbf16>
    %c0_6 = arith.constant 0 : index
    %c0_7 = arith.constant 0 : index
    %10 = vector.load %arg4[%c0_6, %c0_7] : memref<256x256xbf16, #tpu.memory_space<vmem>>, vector<256x256xbf16>
    %cst_8 = arith.constant dense<0.000000e+00> : vector<8x256xf32>
    %11 = tpu.matmul %9, %10, %cst_8 {dimension_numbers = #tpu.dot_dimension_numbers<[1], [0], [0], [1], [0, 0, 1, 1], [], []>} : vector<8x256xbf16>, vector<256x256xbf16>, vector<8x256xf32> -> vector<8x256xf32>
    %c0_9 = arith.constant 0 : index
    %c0_10 = arith.constant 0 : index
    %12 = vector.load %arg5[%c0_9, %c0_10] : memref<1x256xf32, #tpu.memory_space<vmem>>, vector<1x256xf32>
    %13 = vector.broadcast %12 : vector<1x256xf32> to vector<8x256xf32>
    %14 = arith.addf %11, %13 : vector<8x256xf32>
    %cst_11 = arith.constant 0.000000e+00 : f32
    %15 = vector.broadcast %cst_11 : f32 to vector<8x256xf32>
    %16 = arith.maximumf %14, %15 : vector<8x256xf32>
    %c0_12 = arith.constant 0 : index
    %c0_13 = arith.constant 0 : index
    %17 = vector.load %arg6[%c0_12, %c0_13] : memref<1x256xf32, #tpu.memory_space<vmem>>, vector<1x256xf32>
    %18 = vector.broadcast %17 : vector<1x256xf32> to vector<8x256xf32>
    %19 = arith.mulf %16, %18 : vector<8x256xf32>
    %cst_14 = arith.constant dense<0.000000e+00> : vector<8xf32>
    %20 = vector.multi_reduction <add>, %19, %cst_14 [1] : vector<8x256xf32> to vector<8xf32>
    %21 = vector.shape_cast %20 : vector<8xf32> to vector<8x1xf32>
    %c0_15 = arith.constant 0 : index
    %c0_16 = arith.constant 0 : index
    %22 = memref.load %arg7[%c0_15, %c0_16] : memref<1x1xf32, #tpu.memory_space<smem>>
    %23 = vector.broadcast %22 : f32 to vector<8x1xf32>
    %24 = arith.addf %21, %23 : vector<8x1xf32>
    %c0_17 = arith.constant 0 : index
    %c0_18 = arith.constant 0 : index
    %25 = vector.load %arg8[%c0_17, %c0_18] : memref<8x1xf32, #tpu.memory_space<vmem>>, vector<8x1xf32>
    tpu.vector_store %arg8[%c0_17, %c0_18], %24 {strides = array<i32>} : memref<8x1xf32, #tpu.memory_space<vmem>>, vector<8x1xf32>,
    return
  }
  func.func @transform_0(%arg0: i32) -> (i32, i32) {
    %c0_i32 = arith.constant 0 : i32
    %c0_i32_0 = arith.constant 0 : i32
    return %arg0, %c0_i32 : i32, i32
  }
  func.func @transform_1(%arg0: i32) -> (i32, i32) {
    %c0_i32 = arith.constant 0 : i32
    %c0_i32_0 = arith.constant 0 : i32
    %c0_i32_1 = arith.constant 0 : i32
    return %c0_i32, %c0_i32_0 : i32, i32
  }
  func.func @transform_2(%arg0: i32) -> (i32, i32) {
    %c0_i32 = arith.constant 0 : i32
    %c0_i32_0 = arith.constant 0 : i32
    %c0_i32_1 = arith.constant 0 : i32
    return %c0_i32, %c0_i32_0 : i32, i32
  }
  func.func @transform_3(%arg0: i32) -> (i32, i32) {
    %c0_i32 = arith.constant 0 : i32
    %c0_i32_0 = arith.constant 0 : i32
    %c0_i32_1 = arith.constant 0 : i32
    return %c0_i32, %c0_i32_0 : i32, i32
  }
  func.func @transform_4(%arg0: i32) -> (i32, i32) {
    %c0_i32 = arith.constant 0 : i32
    %c0_i32_0 = arith.constant 0 : i32
    %c0_i32_1 = arith.constant 0 : i32
    return %c0_i32, %c0_i32_0 : i32, i32
  }
  func.func @transform_5(%arg0: i32) -> (i32, i32) {
    %c0_i32 = arith.constant 0 : i32
    %c0_i32_0 = arith.constant 0 : i32
    %c0_i32_1 = arith.constant 0 : i32
    return %c0_i32, %c0_i32_0 : i32, i32
  }
  func.func @transform_6(%arg0: i32) -> (i32, i32) {
    %c0_i32 = arith.constant 0 : i32
    %c0_i32_0 = arith.constant 0 : i32
    %c0_i32_1 = arith.constant 0 : i32
    return %c0_i32, %c0_i32_0 : i32, i32
  }
  func.func @transform_7(%arg0: i32) -> (i32, i32) {
    %c0_i32 = arith.constant 0 : i32
    %c0_i32_0 = arith.constant 0 : i32
    return %arg0, %c0_i32 : i32, i32
  }
}

</mosaic_0001>

<llo_original>
// kernel: tpu_custom_call.1
$region0: #{tpu_custom_call.1}
  #allocation0 [shape = 'u32[]', space=smem, size = 0x4, offset = 0x4, fixed_abs, tag = 'smem constant byte address 0x4 - core index']
  #allocation1 [shape = 'u32[144,128]{1,0:T(1,128)}', space=vmem, size = 0x12000, scoped, tag = 'internal scratch']
  #allocation2 [shape = 'f32[1,1]{1,0:T(1,128)S(6)}', space=smem, size = 0x200, scoped, tag = 'scoped memory for tpu_custom_call.1']
  %s0 = inlined_call_operand.hbm [shape: f32[8,128], index: 0, kind: input, shape index: {}]
  %s1 = inlined_call_operand.hbm [shape: bf16[128,256], index: 1, kind: input, shape index: {}]
  %s2 = inlined_call_operand.vmem [shape: f32[1,256], index: 2, kind: input, shape index: {}]
  %s3 = inlined_call_operand.hbm [shape: bf16[256,256], index: 3, kind: input, shape index: {}]
  %s4 = inlined_call_operand.vmem [shape: f32[1,256], index: 4, kind: input, shape index: {}]
  %s5 = inlined_call_operand.vmem [shape: f32[1,256], index: 5, kind: input, shape index: {}]
  %s6 = inlined_call_operand.<no memory space> [shape: f32[1,1], index: 6, kind: input, shape index: {}]
  %s7 = inlined_call_operand.hbm [shape: f32[1,8], index: 7, kind: output, shape index: {}]
  %s8 = sld [smem:[#allocation0]]
  $region50: #{tpu_custom_call.1} parent=0
    _
  %s10 = ssub.s32 1, %s8
  %s11 = scalar_select 0, %s10, %s8
  %12 = sst [smem:[#allocation2]] %s6
  $region1: #{tpu_custom_call.1} parent=0
    #allocation3 [shape = 'u8[4096]{0}', space=vmem, size = 0x1000, scoped, tag = 'input window, operand 0, single buffered']
    #allocation4 [shape = 's32[1]{0}', space=sflag, size = 0x4, scoped, tag = 'scoped memory for tpu_custom_call.1']
    #allocation5 [shape = 's32[1]{0}', space=sflag, size = 0x4, scoped, tag = 'scoped memory for tpu_custom_call.1']
    #allocation6 [shape = 'u8[65536]{0}', space=vmem, size = 0x10000, scoped, tag = 'input window, operand 1, single buffered']
    #allocation7 [shape = 's32[1]{0}', space=sflag, size = 0x4, scoped, tag = 'scoped memory for tpu_custom_call.1']
    #allocation8 [shape = 'u8[131072]{0}', space=vmem, size = 0x20000, scoped, tag = 'input window, operand 3, single buffered']
    #allocation9 [shape = 'u8[512]{0}', space=vmem, size = 0x400, scoped, tag = 'output window, operand 0, single buffered']
    %13 = vsyncpa [#allocation4], 0
    %14 = vsyncpa [#allocation7], 0
    %15 = vsyncpa [#allocation5], 0
    // Predicated region
    $region2: #{tpu_custom_call.1} parent=1 // pred_check
      _
    $region3: #{tpu_custom_call.1} parent=1 // pred_check_branch
      %17 = sbr.rel (0) target = $region5
    $region4: #{tpu_custom_call.1} parent=1 // pred_region
      %s19 = ssub.s32 128, 128
      %20 = vsyncadd [#allocation4], %s19
      %s22 = sshll.u32 [#allocation3], 4
      %s23 = int_to_ptr.vmem [resolvable:$true] %s22
      %25 = dma.hbm_to_vmem [thread:$0]  %s0, 128, %s23, [#allocation4]
    $region5: #{tpu_custom_call.1} parent=1 // pred_fallthru
      _
    // Predicated region
    $region6: #{tpu_custom_call.1} parent=1 // pred_check
      _
    $region7: #{tpu_custom_call.1} parent=1 // pred_check_branch
      %27 = sbr.rel (0) target = $region9
    $region8: #{tpu_custom_call.1} parent=1 // pred_region
      %s29 = ssub.s32 2048, 2048
      %30 = vsyncadd [#allocation7], %s29
      %s31 = sshll.u32 [#allocation6], 4
      %s32 = int_to_ptr.vmem [resolvable:$true] %s31
      %37 = dma.hbm_to_vmem [thread:$0]  %s1, 2048, %s32, [#allocation7], 128, 128, 8
    $region9: #{tpu_custom_call.1} parent=1 // pred_fallthru
      _
    // Predicated region
    $region10: #{tpu_custom_call.1} parent=1 // pred_check
      _
    $region11: #{tpu_custom_call.1} parent=1 // pred_check_branch
      %39 = sbr.rel (0) target = $region13
    $region12: #{tpu_custom_call.1} parent=1 // pred_region
      _
    $region13: #{tpu_custom_call.1} parent=1 // pred_fallthru
      _
    // Predicated region
    $region14: #{tpu_custom_call.1} parent=1 // pred_check
      _
    $region15: #{tpu_custom_call.1} parent=1 // pred_check_branch
      %41 = sbr.rel (0) target = $region17
    $region16: #{tpu_custom_call.1} parent=1 // pred_region
      %s43 = ssub.s32 4096, 4096
      %44 = vsyncadd [#allocation7], %s43
      %s45 = sshll.u32 [#allocation8], 4
      %s46 = int_to_ptr.vmem [resolvable:$true] %s45
      %51 = dma.hbm_to_vmem [thread:$0]  %s3, 4096, %s46, [#allocation7], 128, 128, 8
    $region17: #{tpu_custom_call.1} parent=1 // pred_fallthru
      _
    // Predicated region
    $region18: #{tpu_custom_call.1} parent=1 // pred_check
      _
    $region19: #{tpu_custom_call.1} parent=1 // pred_check_branch
      %53 = sbr.rel (0) target = $region21
    $region20: #{tpu_custom_call.1} parent=1 // pred_region
      _
    $region21: #{tpu_custom_call.1} parent=1 // pred_fallthru
      _
    // Predicated region
    $region22: #{tpu_custom_call.1} parent=1 // pred_check
      _
    $region23: #{tpu_custom_call.1} parent=1 // pred_check_branch
      %55 = sbr.rel (0) target = $region25
    $region24: #{tpu_custom_call.1} parent=1 // pred_region
      _
    $region25: #{tpu_custom_call.1} parent=1 // pred_fallthru
      _
    // Predicated region
    $region26: #{tpu_custom_call.1} parent=1 // pred_check
      _
    $region27: #{tpu_custom_call.1} parent=1 // pred_check_branch
      %57 = sbr.rel (0) target = $region29
    $region28: #{tpu_custom_call.1} parent=1 // pred_region
      _
    $region29: #{tpu_custom_call.1} parent=1 // pred_fallthru
      _
    // Predicated region
    $region30: #{tpu_custom_call.1} parent=1 // pred_check
      _
    $region31: #{tpu_custom_call.1} parent=1 // pred_check_branch
      %59 = sbr.rel (0) target = $region33
    $region32: #{tpu_custom_call.1} parent=1 // pred_region
      %60 = dma.done [#allocation4], 128
    $region33: #{tpu_custom_call.1} parent=1 // pred_fallthru
      _
    // Predicated region
    $region34: #{tpu_custom_call.1} parent=1 // pred_check
      _
    $region35: #{tpu_custom_call.1} parent=1 // pred_check_branch
      %62 = sbr.rel (0) target = $region37
    $region36: #{tpu_custom_call.1} parent=1 // pred_region
      %63 = dma.done [#allocation7], 2048
    $region37: #{tpu_custom_call.1} parent=1 // pred_fallthru
      _
    // Predicated region
    $region38: #{tpu_custom_call.1} parent=1 // pred_check
      _
    $region39: #{tpu_custom_call.1} parent=1 // pred_check_branch
      %65 = sbr.rel (0) target = $region41
    $region40: #{tpu_custom_call.1} parent=1 // pred_region
      %66 = dma.done [#allocation7], 4096
    $region41: #{tpu_custom_call.1} parent=1 // pred_fallthru
      _
    %v68 = vld [vmem:[#allocation3] sm:$0xff]
    %v69 = vpack.c.bf16 %v68, %v68
    %v70 = vld [vmem:[#allocation6] sm:$0xff]
    %v71 = vld [vmem:[#allocation6 + $0x8] sm:$0xff]
    %v72 = vld [vmem:[#allocation6 + $0x10] sm:$0xff]
    %v73 = vld [vmem:[#allocation6 + $0x18] sm:$0xff]
    %v74 = vld [vmem:[#allocation6 + $0x20] sm:$0xff]
    %v75 = vld [vmem:[#allocation6 + $0x28] sm:$0xff]
    %v76 = vld [vmem:[#allocation6 + $0x30] sm:$0xff]
    %v77 = vld [vmem:[#allocation6 + $0x38] sm:$0xff]
    %v78 = vld [vmem:[#allocation6 + $0x40] sm:$0xff]
    %v79 = vld [vmem:[#allocation6 + $0x48] sm:$0xff]
    %v80 = vld [vmem:[#allocation6 + $0x50] sm:$0xff]
    %v81 = vld [vmem:[#allocation6 + $0x58] sm:$0xff]
    %v82 = vld [vmem:[#allocation6 + $0x60] sm:$0xff]
    %v83 = vld [vmem:[#allocation6 + $0x68] sm:$0xff]
    %v84 = vld [vmem:[#allocation6 + $0x70] sm:$0xff]
    %v85 = vld [vmem:[#allocation6 + $0x78] sm:$0xff]
    %v86 = vld [vmem:[%s2] sm:$0x3]
    %v88 = vlaneseq
    %v89 = vshrl.u32 %v88, 7
    %v90 = vsub.s32 0, %v89
    %v91 = vrot.slane %v86, %v90
    %v92 = vlaneseq
    %v93 = vshrl.u32 %v92, 7
    %v94 = vsub.s32 1, %v93
    %v95 = vrot.slane %v86, %v94
    %v114 = vunpack.c.l.b16 %v70
    %v115 = vunpack.c.h.b16 %v70
    %v116 = vunpack.c.l.b16 %v71
    %v117 = vunpack.c.h.b16 %v71
    %v118 = vunpack.c.l.b16 %v72
    %v119 = vunpack.c.h.b16 %v72
    %v120 = vunpack.c.l.b16 %v73
    %v121 = vunpack.c.h.b16 %v73
    %v122 = vunpack.c.l.b16 %v74
    %v123 = vunpack.c.h.b16 %v74
    %v124 = vunpack.c.l.b16 %v75
    %v125 = vunpack.c.h.b16 %v75
    %v126 = vunpack.c.l.b16 %v76
    %v127 = vunpack.c.h.b16 %v76
    %v128 = vunpack.c.l.b16 %v77
    %v129 = vunpack.c.h.b16 %v77
    %v130 = vunpack.c.l.b16 %v78
    %v131 = vunpack.c.h.b16 %v78
    %v132 = vunpack.c.l.b16 %v79
    %v133 = vunpack.c.h.b16 %v79
    %v134 = vunpack.c.l.b16 %v80
    %v135 = vunpack.c.h.b16 %v80
    %v136 = vunpack.c.l.b16 %v81
    %v137 = vunpack.c.h.b16 %v81
    %v138 = vunpack.c.l.b16 %v82
    %v139 = vunpack.c.h.b16 %v82
    %v140 = vunpack.c.l.b16 %v83
    %v141 = vunpack.c.h.b16 %v83
    %v142 = vunpack.c.l.b16 %v84
    %v143 = vunpack.c.h.b16 %v84
    %v144 = vunpack.c.l.b16 %v85
    %v145 = vunpack.c.h.b16 %v85
    %v146 = vpack.c.b16 %v116, %v114
    %v147 = vpack.c.b16 %v117, %v115
    %v148 = vpack.c.b16 %v120, %v118
    %v149 = vpack.c.b16 %v121, %v119
    %v150 = vpack.c.b16 %v124, %v122
    %v151 = vpack.c.b16 %v125, %v123
    %v152 = vpack.c.b16 %v128, %v126
    %v153 = vpack.c.b16 %v129, %v127
    %v154 = vpack.c.b16 %v132, %v130
    %v155 = vpack.c.b16 %v133, %v131
    %v156 = vpack.c.b16 %v136, %v134
    %v157 = vpack.c.b16 %v137, %v135
    %v158 = vpack.c.b16 %v140, %v138
    %v159 = vpack.c.b16 %v141, %v139
    %v160 = vpack.c.b16 %v144, %v142
    %v161 = vpack.c.b16 %v145, %v143
    %178 = vmatprep.subr.bf16.mxu0 %v147
    %179 = vmatpush1.bf16.msra.mxu0 %v146
    %180 = vmatprep.subr.bf16.mxu0 %v149
    %181 = vmatpush1.bf16.msra.mxu0 %v148
    %182 = vmatprep.subr.bf16.mxu0 %v151
    %183 = vmatpush1.bf16.msra.mxu0 %v150
    %184 = vmatprep.subr.bf16.mxu0 %v153
    %185 = vmatpush1.bf16.msra.mxu0 %v152
    %186 = vmatprep.subr.bf16.mxu0 %v155
    %187 = vmatpush1.bf16.msra.mxu0 %v154
    %188 = vmatprep.subr.bf16.mxu0 %v157
    %189 = vmatpush1.bf16.msra.mxu0 %v156
    %190 = vmatprep.subr.bf16.mxu0 %v159
    %191 = vmatpush1.bf16.msra.mxu0 %v158
    %192 = vmatprep.subr.bf16.mxu0 %v161
    %193 = vmatpush1.bf16.msra.mxu0 %v160
    %194 = vmatprep.subr.bf16.mxu0 0
    %195 = vmatpush1.bf16.msra.mxu0 0
    %196 = vmatprep.subr.bf16.mxu0 0
    %197 = vmatpush1.bf16.msra.mxu0 0
    %198 = vmatprep.subr.bf16.mxu0 0
    %199 = vmatpush1.bf16.msra.mxu0 0
    %200 = vmatprep.subr.bf16.mxu0 0
    %201 = vmatpush1.bf16.msra.mxu0 0
    %202 = vmatprep.subr.bf16.mxu0 0
    %203 = vmatpush1.bf16.msra.mxu0 0
    %204 = vmatprep.subr.bf16.mxu0 0
    %205 = vmatpush1.bf16.msra.mxu0 0
    %206 = vmatprep.subr.bf16.mxu0 0
    %207 = vmatpush1.bf16.msra.mxu0 0
    %208 = vmatprep.subr.bf16.mxu0 0
    %209 = vmatpush1.bf16.msra.mxu0 0
    %210 = vmatprep.mubr.bf16.mxu0 0
    %211 = vmatmul.mubr.bf16.gmra.mrb[0].mxu0 %v69
    %v212 = vpop.f32.mrb[0].mxu0
    %v213 = vadd.f32 %v91, %v212
    %v214 = vpop.f32.mrb[0].mxu0
    %v215 = vadd.f32 %v95, %v214
    %v216 = vpop.f32.mrb[0].mxu0
    %v217 = vpop.f32.mrb[0].mxu0
    %218 = vdwg.mxu0
    %v219 = vmax.f32 %v213, 0.0
    %v220 = vmax.f32 %v215, 0.0
    %v221 = vpack.c.bf16 %v219, %v219
    %v222 = vpack.c.bf16 %v220, %v220
    %v223 = vld [vmem:[#allocation8] sm:$0xff]
    %v224 = vld [vmem:[#allocation8 + $0x8] sm:$0xff]
    %v225 = vld [vmem:[#allocation8 + $0x10] sm:$0xff]
    %v226 = vld [vmem:[#allocation8 + $0x18] sm:$0xff]
    %v227 = vld [vmem:[#allocation8 + $0x20] sm:$0xff]
    %v228 = vld [vmem:[#allocation8 + $0x28] sm:$0xff]
    %v229 = vld [vmem:[#allocation8 + $0x30] sm:$0xff]
    %v230 = vld [vmem:[#allocation8 + $0x38] sm:$0xff]
    %v231 = vld [vmem:[#allocation8 + $0x40] sm:$0xff]
    %v232 = vld [vmem:[#allocation8 + $0x48] sm:$0xff]
    %v233 = vld [vmem:[#allocation8 + $0x50] sm:$0xff]
    %v234 = vld [vmem:[#allocation8 + $0x58] sm:$0xff]
    %v235 = vld [vmem:[#allocation8 + $0x60] sm:$0xff]
    %v236 = vld [vmem:[#allocation8 + $0x68] sm:$0xff]
    %v237 = vld [vmem:[#allocation8 + $0x70] sm:$0xff]
    %v238 = vld [vmem:[#allocation8 + $0x78] sm:$0xff]
    %v239 = vld [vmem:[#allocation8 + $0x80] sm:$0xff]
    %v240 = vld [vmem:[#allocation8 + $0x88] sm:$0xff]
    %v241 = vld [vmem:[#allocation8 + $0x90] sm:$0xff]
    %v242 = vld [vmem:[#allocation8 + $0x98] sm:$0xff]
    %v243 = vld [vmem:[#allocation8 + $0xa0] sm:$0xff]
    %v244 = vld [vmem:[#allocation8 + $0xa8] sm:$0xff]
    %v245 = vld [vmem:[#allocation8 + $0xb0] sm:$0xff]
    %v246 = vld [vmem:[#allocation8 + $0xb8] sm:$0xff]
    %v247 = vld [vmem:[#allocation8 + $0xc0] sm:$0xff]
    %v248 = vld [vmem:[#allocation8 + $0xc8] sm:$0xff]
    %v249 = vld [vmem:[#allocation8 + $0xd0] sm:$0xff]
    %v250 = vld [vmem:[#allocation8 + $0xd8] sm:$0xff]
    %v251 = vld [vmem:[#allocation8 + $0xe0] sm:$0xff]
    %v252 = vld [vmem:[#allocation8 + $0xe8] sm:$0xff]
    %v253 = vld [vmem:[#allocation8 + $0xf0] sm:$0xff]
    %v254 = vld [vmem:[#allocation8 + $0xf8] sm:$0xff]
    %v255 = vld [vmem:[%s4] sm:$0x3]
    %v257 = vlaneseq
    %v258 = vshrl.u32 %v257, 7
    %v259 = vsub.s32 0, %v258
    %v260 = vrot.slane %v255, %v259
    %v261 = vlaneseq
    %v262 = vshrl.u32 %v261, 7
    %v263 = vsub.s32 1, %v262
    %v264 = vrot.slane %v255, %v263
    %v299 = vunpack.c.l.b16 %v223
    %v300 = vunpack.c.h.b16 %v223
    %v301 = vunpack.c.l.b16 %v224
    %v302 = vunpack.c.h.b16 %v224
    %v303 = vunpack.c.l.b16 %v225
    %v304 = vunpack.c.h.b16 %v225
    %v305 = vunpack.c.l.b16 %v226
    %v306 = vunpack.c.h.b16 %v226
    %v307 = vunpack.c.l.b16 %v227
    %v308 = vunpack.c.h.b16 %v227
    %v309 = vunpack.c.l.b16 %v228
    %v310 = vunpack.c.h.b16 %v228
    %v311 = vunpack.c.l.b16 %v229
    %v312 = vunpack.c.h.b16 %v229
    %v313 = vunpack.c.l.b16 %v230
    %v314 = vunpack.c.h.b16 %v230
    %v315 = vunpack.c.l.b16 %v231
    %v316 = vunpack.c.h.b16 %v231
    %v317 = vunpack.c.l.b16 %v232
    %v318 = vunpack.c.h.b16 %v232
    %v319 = vunpack.c.l.b16 %v233
    %v320 = vunpack.c.h.b16 %v233
    %v321 = vunpack.c.l.b16 %v234
    %v322 = vunpack.c.h.b16 %v234
    %v323 = vunpack.c.l.b16 %v235
    %v324 = vunpack.c.h.b16 %v235
    %v325 = vunpack.c.l.b16 %v236
    %v326 = vunpack.c.h.b16 %v236
    %v327 = vunpack.c.l.b16 %v237
    %v328 = vunpack.c.h.b16 %v237
    %v329 = vunpack.c.l.b16 %v238
    %v330 = vunpack.c.h.b16 %v238
    %v331 = vunpack.c.l.b16 %v239
    %v332 = vunpack.c.h.b16 %v239
    %v333 = vunpack.c.l.b16 %v240
    %v334 = vunpack.c.h.b16 %v240
    %v335 = vunpack.c.l.b16 %v241
    %v336 = vunpack.c.h.b16 %v241
    %v337 = vunpack.c.l.b16 %v242
    %v338 = vunpack.c.h.b16 %v242
    %v339 = vunpack.c.l.b16 %v243
    %v340 = vunpack.c.h.b16 %v243
    %v341 = vunpack.c.l.b16 %v244
    %v342 = vunpack.c.h.b16 %v244
    %v343 = vunpack.c.l.b16 %v245
    %v344 = vunpack.c.h.b16 %v245
    %v345 = vunpack.c.l.b16 %v246
    %v346 = vunpack.c.h.b16 %v246
    %v347 = vunpack.c.l.b16 %v247
    %v348 = vunpack.c.h.b16 %v247
    %v349 = vunpack.c.l.b16 %v248
    %v350 = vunpack.c.h.b16 %v248
    %v351 = vunpack.c.l.b16 %v249
    %v352 = vunpack.c.h.b16 %v249
    %v353 = vunpack.c.l.b16 %v250
    %v354 = vunpack.c.h.b16 %v250
    %v355 = vunpack.c.l.b16 %v251
    %v356 = vunpack.c.h.b16 %v251
    %v357 = vunpack.c.l.b16 %v252
    %v358 = vunpack.c.h.b16 %v252
    %v359 = vunpack.c.l.b16 %v253
    %v360 = vunpack.c.h.b16 %v253
    %v361 = vunpack.c.l.b16 %v254
    %v362 = vunpack.c.h.b16 %v254
    %v363 = vpack.c.b16 %v301, %v299
    %v364 = vpack.c.b16 %v302, %v300
    %v365 = vpack.c.b16 %v305, %v303
    %v366 = vpack.c.b16 %v306, %v304
    %v367 = vpack.c.b16 %v309, %v307
    %v368 = vpack.c.b16 %v310, %v308
    %v369 = vpack.c.b16 %v313, %v311
    %v370 = vpack.c.b16 %v314, %v312
    %v371 = vpack.c.b16 %v317, %v315
    %v372 = vpack.c.b16 %v318, %v316
    %v373 = vpack.c.b16 %v321, %v319
    %v374 = vpack.c.b16 %v322, %v320
    %v375 = vpack.c.b16 %v325, %v323
    %v376 = vpack.c.b16 %v326, %v324
    %v377 = vpack.c.b16 %v329, %v327
    %v378 = vpack.c.b16 %v330, %v328
    %v379 = vpack.c.b16 %v333, %v331
    %v380 = vpack.c.b16 %v334, %v332
    %v381 = vpack.c.b16 %v337, %v335
    %v382 = vpack.c.b16 %v338, %v336
    %v383 = vpack.c.b16 %v341, %v339
    %v384 = vpack.c.b16 %v342, %v340
    %v385 = vpack.c.b16 %v345, %v343
    %v386 = vpack.c.b16 %v346, %v344
    %v387 = vpack.c.b16 %v349, %v347
    %v388 = vpack.c.b16 %v350, %v348
    %v389 = vpack.c.b16 %v353, %v351
    %v390 = vpack.c.b16 %v354, %v352
    %v391 = vpack.c.b16 %v357, %v355
    %v392 = vpack.c.b16 %v358, %v356
    %v393 = vpack.c.b16 %v361, %v359
    %v394 = vpack.c.b16 %v362, %v360
    %427 = vmatprep.subr.bf16.mxu0 %v364
    %428 = vmatpush1.bf16.msra.mxu0 %v363
    %429 = vmatprep.subr.bf16.mxu0 %v366
    %430 = vmatpush1.bf16.msra.mxu0 %v365
    %431 = vmatprep.subr.bf16.mxu0 %v368
    %432 = vmatpush1.bf16.msra.mxu0 %v367
    %433 = vmatprep.subr.bf16.mxu0 %v370
    %434 = vmatpush1.bf16.msra.mxu0 %v369
    %435 = vmatprep.subr.bf16.mxu0 %v372
    %436 = vmatpush1.bf16.msra.mxu0 %v371
    %437 = vmatprep.subr.bf16.mxu0 %v374
    %438 = vmatpush1.bf16.msra.mxu0 %v373
    %439 = vmatprep.subr.bf16.mxu0 %v376
    %440 = vmatpush1.bf16.msra.mxu0 %v375
    %441 = vmatprep.subr.bf16.mxu0 %v378
    %442 = vmatpush1.bf16.msra.mxu0 %v377
    %443 = vmatprep.subr.bf16.mxu0 %v380
    %444 = vmatpush1.bf16.msra.mxu0 %v379
    %445 = vmatprep.subr.bf16.mxu0 %v382
    %446 = vmatpush1.bf16.msra.mxu0 %v381
    %447 = vmatprep.subr.bf16.mxu0 %v384
    %448 = vmatpush1.bf16.msra.mxu0 %v383
    %449 = vmatprep.subr.bf16.mxu0 %v386
    %450 = vmatpush1.bf16.msra.mxu0 %v385
    %451 = vmatprep.subr.bf16.mxu0 %v388
    %452 = vmatpush1.bf16.msra.mxu0 %v387
    %453 = vmatprep.subr.bf16.mxu0 %v390
    %454 = vmatpush1.bf16.msra.mxu0 %v389
    %455 = vmatprep.subr.bf16.mxu0 %v392
    %456 = vmatpush1.bf16.msra.mxu0 %v391
    %457 = vmatprep.subr.bf16.mxu0 %v394
    %458 = vmatpush1.bf16.msra.mxu0 %v393
    %459 = vmatprep.mubr.bf16.mxu0 %v222
    %460 = vmatmul.mubr.bf16.gmra.mrb[0].mxu0 %v221
    %v461 = vpop.f32.mrb[0].mxu0
    %v462 = vadd.f32 %v260, %v461
    %v463 = vpop.f32.mrb[0].mxu0
    %v464 = vadd.f32 %v264, %v463
    %v465 = vpop.f32.mrb[0].mxu0
    %v466 = vpop.f32.mrb[0].mxu0
    %467 = vdwg.mxu0
    %v468 = vmax.f32 %v462, 0.0
    %v469 = vmax.f32 %v464, 0.0
    %v470 = vld [vmem:[%s5] sm:$0x3]
    %v472 = vlaneseq
    %v473 = vshrl.u32 %v472, 7
    %v474 = vsub.s32 0, %v473
    %v475 = vrot.slane %v470, %v474
    %v476 = vlaneseq
    %v477 = vshrl.u32 %v476, 7
    %v478 = vsub.s32 1, %v477
    %v479 = vrot.slane %v470, %v478
    %v482 = vmul.f32 %v468, %v475
    %v483 = vmul.f32 %v469, %v479
    %v484 = vadd.f32 %v482, %v483
    %485 = vadd.xlane.f32.xlu0 %v484
    %v486 = vpop.xlane.xlu0 %485
    %s487 = sld [smem:[#allocation2]]
    %v488 = vstv %s487
    %v489 = vadd.f32 %v486, %v488
    %v491 = vlaneseq
    %v492 = vand.u32 %v491, 127
    %v493 = vlaneseq
    %v494 = vshrl.u32 %v493, 7
    %v495 = vsub.s32 %v492, %v494
    %v496 = vrot.slane %v489, %v495
    %vm498 = vcmask 57344
    %499 = vst.msk [vmem:[#allocation9] sm:$0x1] %vm498, %v496
    // Predicated region
    $region42: #{tpu_custom_call.1} parent=1 // pred_check
      _
    $region43: #{tpu_custom_call.1} parent=1 // pred_check_branch
      %501 = sbr.rel (0) target = $region45
    $region44: #{tpu_custom_call.1} parent=1 // pred_region
      %s503 = ssub.s32 16, 16
      %504 = vsyncadd [#allocation5], %s503
      %s506 = sshll.u32 [#allocation9], 4
      %s507 = int_to_ptr.vmem [resolvable:$true] %s506
      %509 = dma.vmem_to_hbm [thread:$0]  %s507, 16, %s7, [#allocation5]
    $region45: #{tpu_custom_call.1} parent=1 // pred_fallthru
      _
    // Predicated region
    $region46: #{tpu_custom_call.1} parent=1 // pred_check
      _
    $region47: #{tpu_custom_call.1} parent=1 // pred_check_branch
      %511 = sbr.rel (0) target = $region49
    $region48: #{tpu_custom_call.1} parent=1 // pred_region
      %512 = dma.done [#allocation5], 16
    $region49: #{tpu_custom_call.1} parent=1 // pred_fallthru
      _
    %513 = vsyncpa [#allocation4], 1
    %514 = vsyncpa [#allocation7], 1
    %515 = vsyncpa [#allocation5], 1

// kernel: tpu_custom_call.1
$region0: #{tpu_custom_call.1}
  #allocation0 [shape = 'u32[]', space=smem, size = 0x4, offset = 0x4, fixed_abs, tag = 'smem constant byte address 0x4 - core index']
  #allocation1 [shape = 'u32[144,128]{1,0:T(1,128)}', space=vmem, size = 0x12000, scoped, tag = 'internal scratch']
  #allocation2 [shape = 'f32[1,1]{1,0:T(1,128)S(6)}', space=smem, size = 0x200, scoped, tag = 'scoped memory for tpu_custom_call.1']
  %s0 = inlined_call_operand.hbm [shape: f32[8,128], index: 0, kind: input, shape index: {}]
  %s1 = inlined_call_operand.hbm [shape: bf16[128,256], index: 1, kind: input, shape index: {}]
  %s2 = inlined_call_operand.vmem [shape: f32[1,256], index: 2, kind: input, shape index: {}]
  %s3 = inlined_call_operand.hbm [shape: bf16[256,256], index: 3, kind: input, shape index: {}]
  %s4 = inlined_call_operand.vmem [shape: f32[1,256], index: 4, kind: input, shape index: {}]
  %s5 = inlined_call_operand.vmem [shape: f32[1,256], index: 5, kind: input, shape index: {}]
  %s6 = inlined_call_operand.<no memory space> [shape: f32[1,1], index: 6, kind: input, shape index: {}]
  %s7 = inlined_call_operand.vmem [shape: f32[8,1], index: 7, kind: output, shape index: {}]
  %s8 = sld [smem:[#allocation0]]
  $region50: #{tpu_custom_call.1} parent=0
    _
  %s10 = ssub.s32 1, %s8
  %s11 = scalar_select 0, %s10, %s8
  %12 = sst [smem:[#allocation2]] %s6
  $region1: #{tpu_custom_call.1} parent=0
    #allocation3 [shape = 'u8[4096]{0}', space=vmem, size = 0x1000, scoped, tag = 'input window, operand 0, single buffered']
    #allocation4 [shape = 's32[1]{0}', space=sflag, size = 0x4, scoped, tag = 'scoped memory for tpu_custom_call.1']
    #allocation5 [shape = 'u8[65536]{0}', space=vmem, size = 0x10000, scoped, tag = 'input window, operand 1, single buffered']
    #allocation6 [shape = 's32[1]{0}', space=sflag, size = 0x4, scoped, tag = 'scoped memory for tpu_custom_call.1']
    #allocation7 [shape = 'u8[131072]{0}', space=vmem, size = 0x20000, scoped, tag = 'input window, operand 3, single buffered']
    %13 = vsyncpa [#allocation4], 0
    %14 = vsyncpa [#allocation6], 0
    // Predicated region
    $region2: #{tpu_custom_call.1} parent=1 // pred_check
      _
    $region3: #{tpu_custom_call.1} parent=1 // pred_check_branch
      %16 = sbr.rel (0) target = $region5
    $region4: #{tpu_custom_call.1} parent=1 // pred_region
      %s18 = ssub.s32 128, 128
      %19 = vsyncadd [#allocation4], %s18
      %s21 = sshll.u32 [#allocation3], 4
      %s22 = int_to_ptr.vmem [resolvable:$true] %s21
      %24 = dma.hbm_to_vmem [thread:$0]  %s0, 128, %s22, [#allocation4]
    $region5: #{tpu_custom_call.1} parent=1 // pred_fallthru
      _
    // Predicated region
    $region6: #{tpu_custom_call.1} parent=1 // pred_check
      _
    $region7: #{tpu_custom_call.1} parent=1 // pred_check_branch
      %26 = sbr.rel (0) target = $region9
    $region8: #{tpu_custom_call.1} parent=1 // pred_region
      %s28 = ssub.s32 2048, 2048
      %29 = vsyncadd [#allocation6], %s28
      %s30 = sshll.u32 [#allocation5], 4
      %s31 = int_to_ptr.vmem [resolvable:$true] %s30
      %36 = dma.hbm_to_vmem [thread:$0]  %s1, 2048, %s31, [#allocation6], 128, 128, 8
    $region9: #{tpu_custom_call.1} parent=1 // pred_fallthru
      _
    // Predicated region
    $region10: #{tpu_custom_call.1} parent=1 // pred_check
      _
    $region11: #{tpu_custom_call.1} parent=1 // pred_check_branch
      %38 = sbr.rel (0) target = $region13
    $region12: #{tpu_custom_call.1} parent=1 // pred_region
      _
    $region13: #{tpu_custom_call.1} parent=1 // pred_fallthru
      _
    // Predicated region
    $region14: #{tpu_custom_call.1} parent=1 // pred_check
      _
    $region15: #{tpu_custom_call.1} parent=1 // pred_check_branch
      %40 = sbr.rel (0) target = $region17
    $region16: #{tpu_custom_call.1} parent=1 // pred_region
      %s42 = ssub.s32 4096, 4096
      %43 = vsyncadd [#allocation6], %s42
      %s44 = sshll.u32 [#allocation7], 4
      %s45 = int_to_ptr.vmem [resolvable:$true] %s44
      %50 = dma.hbm_to_vmem [thread:$0]  %s3, 4096, %s45, [#allocation6], 128, 128, 8
    $region17: #{tpu_custom_call.1} parent=1 // pred_fallthru
      _
    // Predicated region
    $region18: #{tpu_custom_call.1} parent=1 // pred_check
      _
    $region19: #{tpu_custom_call.1} parent=1 // pred_check_branch
      %52 = sbr.rel (0) target = $region21
    $region20: #{tpu_custom_call.1} parent=1 // pred_region
      _
    $region21: #{tpu_custom_call.1} parent=1 // pred_fallthru
      _
    // Predicated region
    $region22: #{tpu_custom_call.1} parent=1 // pred_check
      _
    $region23: #{tpu_custom_call.1} parent=1 // pred_check_branch
      %54 = sbr.rel (0) target = $region25
    $region24: #{tpu_custom_call.1} parent=1 // pred_region
      _
    $region25: #{tpu_custom_call.1} parent=1 // pred_fallthru
      _
    // Predicated region
    $region26: #{tpu_custom_call.1} parent=1 // pred_check
      _
    $region27: #{tpu_custom_call.1} parent=1 // pred_check_branch
      %56 = sbr.rel (0) target = $region29
    $region28: #{tpu_custom_call.1} parent=1 // pred_region
      _
    $region29: #{tpu_custom_call.1} parent=1 // pred_fallthru
      _
    // Predicated region
    $region30: #{tpu_custom_call.1} parent=1 // pred_check
      _
    $region31: #{tpu_custom_call.1} parent=1 // pred_check_branch
      %58 = sbr.rel (0) target = $region33
    $region32: #{tpu_custom_call.1} parent=1 // pred_region
      %59 = dma.done [#allocation4], 128
    $region33: #{tpu_custom_call.1} parent=1 // pred_fallthru
      _
    // Predicated region
    $region34: #{tpu_custom_call.1} parent=1 // pred_check
      _
    $region35: #{tpu_custom_call.1} parent=1 // pred_check_branch
      %61 = sbr.rel (0) target = $region37
    $region36: #{tpu_custom_call.1} parent=1 // pred_region
      %62 = dma.done [#allocation6], 2048
    $region37: #{tpu_custom_call.1} parent=1 // pred_fallthru
      _
    // Predicated region
    $region38: #{tpu_custom_call.1} parent=1 // pred_check
      _
    $region39: #{tpu_custom_call.1} parent=1 // pred_check_branch
      %64 = sbr.rel (0) target = $region41
    $region40: #{tpu_custom_call.1} parent=1 // pred_region
      %65 = dma.done [#allocation6], 4096
    $region41: #{tpu_custom_call.1} parent=1 // pred_fallthru
      _
    %v67 = vld [vmem:[#allocation3] sm:$0xff]
    %v68 = vpack.c.bf16 %v67, %v67
    %v69 = vld [vmem:[#allocation5] sm:$0xff]
    %v70 = vld [vmem:[#allocation5 + $0x8] sm:$0xff]
    %v71 = vld [vmem:[#allocation5 + $0x10] sm:$0xff]
    %v72 = vld [vmem:[#allocation5 + $0x18] sm:$0xff]
    %v73 = vld [vmem:[#allocation5 + $0x20] sm:$0xff]
    %v74 = vld [vmem:[#allocation5 + $0x28] sm:$0xff]
    %v75 = vld [vmem:[#allocation5 + $0x30] sm:$0xff]
    %v76 = vld [vmem:[#allocation5 + $0x38] sm:$0xff]
    %v77 = vld [vmem:[#allocation5 + $0x40] sm:$0xff]
    %v78 = vld [vmem:[#allocation5 + $0x48] sm:$0xff]
    %v79 = vld [vmem:[#allocation5 + $0x50] sm:$0xff]
    %v80 = vld [vmem:[#allocation5 + $0x58] sm:$0xff]
    %v81 = vld [vmem:[#allocation5 + $0x60] sm:$0xff]
    %v82 = vld [vmem:[#allocation5 + $0x68] sm:$0xff]
    %v83 = vld [vmem:[#allocation5 + $0x70] sm:$0xff]
    %v84 = vld [vmem:[#allocation5 + $0x78] sm:$0xff]
    %v85 = vld [vmem:[%s2] sm:$0x3]
    %v87 = vlaneseq
    %v88 = vshrl.u32 %v87, 7
    %v89 = vsub.s32 0, %v88
    %v90 = vrot.slane %v85, %v89
    %v91 = vlaneseq
    %v92 = vshrl.u32 %v91, 7
    %v93 = vsub.s32 1, %v92
    %v94 = vrot.slane %v85, %v93
    %v113 = vunpack.c.l.b16 %v69
    %v114 = vunpack.c.h.b16 %v69
    %v115 = vunpack.c.l.b16 %v70
    %v116 = vunpack.c.h.b16 %v70
    %v117 = vunpack.c.l.b16 %v71
    %v118 = vunpack.c.h.b16 %v71
    %v119 = vunpack.c.l.b16 %v72
    %v120 = vunpack.c.h.b16 %v72
    %v121 = vunpack.c.l.b16 %v73
    %v122 = vunpack.c.h.b16 %v73
    %v123 = vunpack.c.l.b16 %v74
    %v124 = vunpack.c.h.b16 %v74
    %v125 = vunpack.c.l.b16 %v75
    %v126 = vunpack.c.h.b16 %v75
    %v127 = vunpack.c.l.b16 %v76
    %v128 = vunpack.c.h.b16 %v76
    %v129 = vunpack.c.l.b16 %v77
    %v130 = vunpack.c.h.b16 %v77
    %v131 = vunpack.c.l.b16 %v78
    %v132 = vunpack.c.h.b16 %v78
    %v133 = vunpack.c.l.b16 %v79
    %v134 = vunpack.c.h.b16 %v79
    %v135 = vunpack.c.l.b16 %v80
    %v136 = vunpack.c.h.b16 %v80
    %v137 = vunpack.c.l.b16 %v81
    %v138 = vunpack.c.h.b16 %v81
    %v139 = vunpack.c.l.b16 %v82
    %v140 = vunpack.c.h.b16 %v82
    %v141 = vunpack.c.l.b16 %v83
    %v142 = vunpack.c.h.b16 %v83
    %v143 = vunpack.c.l.b16 %v84
    %v144 = vunpack.c.h.b16 %v84
    %v145 = vpack.c.b16 %v115, %v113
    %v146 = vpack.c.b16 %v116, %v114
    %v147 = vpack.c.b16 %v119, %v117
    %v148 = vpack.c.b16 %v120, %v118
    %v149 = vpack.c.b16 %v123, %v121
    %v150 = vpack.c.b16 %v124, %v122
    %v151 = vpack.c.b16 %v127, %v125
    %v152 = vpack.c.b16 %v128, %v126
    %v153 = vpack.c.b16 %v131, %v129
    %v154 = vpack.c.b16 %v132, %v130
    %v155 = vpack.c.b16 %v135, %v133
    %v156 = vpack.c.b16 %v136, %v134
    %v157 = vpack.c.b16 %v139, %v137
    %v158 = vpack.c.b16 %v140, %v138
    %v159 = vpack.c.b16 %v143, %v141
    %v160 = vpack.c.b16 %v144, %v142
    %177 = vmatprep.subr.bf16.mxu0 %v146
    %178 = vmatpush1.bf16.msra.mxu0 %v145
    %179 = vmatprep.subr.bf16.mxu0 %v148
    %180 = vmatpush1.bf16.msra.mxu0 %v147
    %181 = vmatprep.subr.bf16.mxu0 %v150
    %182 = vmatpush1.bf16.msra.mxu0 %v149
    %183 = vmatprep.subr.bf16.mxu0 %v152
    %184 = vmatpush1.bf16.msra.mxu0 %v151
    %185 = vmatprep.subr.bf16.mxu0 %v154
    %186 = vmatpush1.bf16.msra.mxu0 %v153
    %187 = vmatprep.subr.bf16.mxu0 %v156
    %188 = vmatpush1.bf16.msra.mxu0 %v155
    %189 = vmatprep.subr.bf16.mxu0 %v158
    %190 = vmatpush1.bf16.msra.mxu0 %v157
    %191 = vmatprep.subr.bf16.mxu0 %v160
    %192 = vmatpush1.bf16.msra.mxu0 %v159
    %193 = vmatprep.subr.bf16.mxu0 0
    %194 = vmatpush1.bf16.msra.mxu0 0
    %195 = vmatprep.subr.bf16.mxu0 0
    %196 = vmatpush1.bf16.msra.mxu0 0
    %197 = vmatprep.subr.bf16.mxu0 0
    %198 = vmatpush1.bf16.msra.mxu0 0
    %199 = vmatprep.subr.bf16.mxu0 0
    %200 = vmatpush1.bf16.msra.mxu0 0
    %201 = vmatprep.subr.bf16.mxu0 0
    %202 = vmatpush1.bf16.msra.mxu0 0
    %203 = vmatprep.subr.bf16.mxu0 0
    %204 = vmatpush1.bf16.msra.mxu0 0
    %205 = vmatprep.subr.bf16.mxu0 0
    %206 = vmatpush1.bf16.msra.mxu0 0
    %207 = vmatprep.subr.bf16.mxu0 0
    %208 = vmatpush1.bf16.msra.mxu0 0
    %209 = vmatprep.mubr.bf16.mxu0 0
    %210 = vmatmul.mubr.bf16.gmra.mrb[0].mxu0 %v68
    %v211 = vpop.f32.mrb[0].mxu0
    %v212 = vadd.f32 %v90, %v211
    %v213 = vpop.f32.mrb[0].mxu0
    %v214 = vadd.f32 %v94, %v213
    %v215 = vpop.f32.mrb[0].mxu0
    %v216 = vpop.f32.mrb[0].mxu0
    %217 = vdwg.mxu0
    %v218 = vmax.f32 %v212, 0.0
    %v219 = vmax.f32 %v214, 0.0
    %v220 = vpack.c.bf16 %v218, %v218
    %v221 = vpack.c.bf16 %v219, %v219
    %v222 = vld [vmem:[#allocation7] sm:$0xff]
    %v223 = vld [vmem:[#allocation7 + $0x8] sm:$0xff]
    %v224 = vld [vmem:[#allocation7 + $0x10] sm:$0xff]
    %v225 = vld [vmem:[#allocation7 + $0x18] sm:$0xff]
    %v226 = vld [vmem:[#allocation7 + $0x20] sm:$0xff]
    %v227 = vld [vmem:[#allocation7 + $0x28] sm:$0xff]
    %v228 = vld [vmem:[#allocation7 + $0x30] sm:$0xff]
    %v229 = vld [vmem:[#allocation7 + $0x38] sm:$0xff]
    %v230 = vld [vmem:[#allocation7 + $0x40] sm:$0xff]
    %v231 = vld [vmem:[#allocation7 + $0x48] sm:$0xff]
    %v232 = vld [vmem:[#allocation7 + $0x50] sm:$0xff]
    %v233 = vld [vmem:[#allocation7 + $0x58] sm:$0xff]
    %v234 = vld [vmem:[#allocation7 + $0x60] sm:$0xff]
    %v235 = vld [vmem:[#allocation7 + $0x68] sm:$0xff]
    %v236 = vld [vmem:[#allocation7 + $0x70] sm:$0xff]
    %v237 = vld [vmem:[#allocation7 + $0x78] sm:$0xff]
    %v238 = vld [vmem:[#allocation7 + $0x80] sm:$0xff]
    %v239 = vld [vmem:[#allocation7 + $0x88] sm:$0xff]
    %v240 = vld [vmem:[#allocation7 + $0x90] sm:$0xff]
    %v241 = vld [vmem:[#allocation7 + $0x98] sm:$0xff]
    %v242 = vld [vmem:[#allocation7 + $0xa0] sm:$0xff]
    %v243 = vld [vmem:[#allocation7 + $0xa8] sm:$0xff]
    %v244 = vld [vmem:[#allocation7 + $0xb0] sm:$0xff]
    %v245 = vld [vmem:[#allocation7 + $0xb8] sm:$0xff]
    %v246 = vld [vmem:[#allocation7 + $0xc0] sm:$0xff]
    %v247 = vld [vmem:[#allocation7 + $0xc8] sm:$0xff]
    %v248 = vld [vmem:[#allocation7 + $0xd0] sm:$0xff]
    %v249 = vld [vmem:[#allocation7 + $0xd8] sm:$0xff]
    %v250 = vld [vmem:[#allocation7 + $0xe0] sm:$0xff]
    %v251 = vld [vmem:[#allocation7 + $0xe8] sm:$0xff]
    %v252 = vld [vmem:[#allocation7 + $0xf0] sm:$0xff]
    %v253 = vld [vmem:[#allocation7 + $0xf8] sm:$0xff]
    %v254 = vld [vmem:[%s4] sm:$0x3]
    %v256 = vlaneseq
    %v257 = vshrl.u32 %v256, 7
    %v258 = vsub.s32 0, %v257
    %v259 = vrot.slane %v254, %v258
    %v260 = vlaneseq
    %v261 = vshrl.u32 %v260, 7
    %v262 = vsub.s32 1, %v261
    %v263 = vrot.slane %v254, %v262
    %v298 = vunpack.c.l.b16 %v222
    %v299 = vunpack.c.h.b16 %v222
    %v300 = vunpack.c.l.b16 %v223
    %v301 = vunpack.c.h.b16 %v223
    %v302 = vunpack.c.l.b16 %v224
    %v303 = vunpack.c.h.b16 %v224
    %v304 = vunpack.c.l.b16 %v225
    %v305 = vunpack.c.h.b16 %v225
    %v306 = vunpack.c.l.b16 %v226
    %v307 = vunpack.c.h.b16 %v226
    %v308 = vunpack.c.l.b16 %v227
    %v309 = vunpack.c.h.b16 %v227
    %v310 = vunpack.c.l.b16 %v228
    %v311 = vunpack.c.h.b16 %v228
    %v312 = vunpack.c.l.b16 %v229
    %v313 = vunpack.c.h.b16 %v229
    %v314 = vunpack.c.l.b16 %v230
    %v315 = vunpack.c.h.b16 %v230
    %v316 = vunpack.c.l.b16 %v231
    %v317 = vunpack.c.h.b16 %v231
    %v318 = vunpack.c.l.b16 %v232
    %v319 = vunpack.c.h.b16 %v232
    %v320 = vunpack.c.l.b16 %v233
    %v321 = vunpack.c.h.b16 %v233
    %v322 = vunpack.c.l.b16 %v234
    %v323 = vunpack.c.h.b16 %v234
    %v324 = vunpack.c.l.b16 %v235
    %v325 = vunpack.c.h.b16 %v235
    %v326 = vunpack.c.l.b16 %v236
    %v327 = vunpack.c.h.b16 %v236
    %v328 = vunpack.c.l.b16 %v237
    %v329 = vunpack.c.h.b16 %v237
    %v330 = vunpack.c.l.b16 %v238
    %v331 = vunpack.c.h.b16 %v238
    %v332 = vunpack.c.l.b16 %v239
    %v333 = vunpack.c.h.b16 %v239
    %v334 = vunpack.c.l.b16 %v240
    %v335 = vunpack.c.h.b16 %v240
    %v336 = vunpack.c.l.b16 %v241
    %v337 = vunpack.c.h.b16 %v241
    %v338 = vunpack.c.l.b16 %v242
    %v339 = vunpack.c.h.b16 %v242
    %v340 = vunpack.c.l.b16 %v243
    %v341 = vunpack.c.h.b16 %v243
    %v342 = vunpack.c.l.b16 %v244
    %v343 = vunpack.c.h.b16 %v244
    %v344 = vunpack.c.l.b16 %v245
    %v345 = vunpack.c.h.b16 %v245
    %v346 = vunpack.c.l.b16 %v246
    %v347 = vunpack.c.h.b16 %v246
    %v348 = vunpack.c.l.b16 %v247
    %v349 = vunpack.c.h.b16 %v247
    %v350 = vunpack.c.l.b16 %v248
    %v351 = vunpack.c.h.b16 %v248
    %v352 = vunpack.c.l.b16 %v249
    %v353 = vunpack.c.h.b16 %v249
    %v354 = vunpack.c.l.b16 %v250
    %v355 = vunpack.c.h.b16 %v250
    %v356 = vunpack.c.l.b16 %v251
    %v357 = vunpack.c.h.b16 %v251
    %v358 = vunpack.c.l.b16 %v252
    %v359 = vunpack.c.h.b16 %v252
    %v360 = vunpack.c.l.b16 %v253
    %v361 = vunpack.c.h.b16 %v253
    %v362 = vpack.c.b16 %v300, %v298
    %v363 = vpack.c.b16 %v301, %v299
    %v364 = vpack.c.b16 %v304, %v302
    %v365 = vpack.c.b16 %v305, %v303
    %v366 = vpack.c.b16 %v308, %v306
    %v367 = vpack.c.b16 %v309, %v307
    %v368 = vpack.c.b16 %v312, %v310
    %v369 = vpack.c.b16 %v313, %v311
    %v370 = vpack.c.b16 %v316, %v314
    %v371 = vpack.c.b16 %v317, %v315
    %v372 = vpack.c.b16 %v320, %v318
    %v373 = vpack.c.b16 %v321, %v319
    %v374 = vpack.c.b16 %v324, %v322
    %v375 = vpack.c.b16 %v325, %v323
    %v376 = vpack.c.b16 %v328, %v326
    %v377 = vpack.c.b16 %v329, %v327
    %v378 = vpack.c.b16 %v332, %v330
    %v379 = vpack.c.b16 %v333, %v331
    %v380 = vpack.c.b16 %v336, %v334
    %v381 = vpack.c.b16 %v337, %v335
    %v382 = vpack.c.b16 %v340, %v338
    %v383 = vpack.c.b16 %v341, %v339
    %v384 = vpack.c.b16 %v344, %v342
    %v385 = vpack.c.b16 %v345, %v343
    %v386 = vpack.c.b16 %v348, %v346
    %v387 = vpack.c.b16 %v349, %v347
    %v388 = vpack.c.b16 %v352, %v350
    %v389 = vpack.c.b16 %v353, %v351
    %v390 = vpack.c.b16 %v356, %v354
    %v391 = vpack.c.b16 %v357, %v355
    %v392 = vpack.c.b16 %v360, %v358
    %v393 = vpack.c.b16 %v361, %v359
    %426 = vmatprep.subr.bf16.mxu0 %v363
    %427 = vmatpush1.bf16.msra.mxu0 %v362
    %428 = vmatprep.subr.bf16.mxu0 %v365
    %429 = vmatpush1.bf16.msra.mxu0 %v364
    %430 = vmatprep.subr.bf16.mxu0 %v367
    %431 = vmatpush1.bf16.msra.mxu0 %v366
    %432 = vmatprep.subr.bf16.mxu0 %v369
    %433 = vmatpush1.bf16.msra.mxu0 %v368
    %434 = vmatprep.subr.bf16.mxu0 %v371
    %435 = vmatpush1.bf16.msra.mxu0 %v370
    %436 = vmatprep.subr.bf16.mxu0 %v373
    %437 = vmatpush1.bf16.msra.mxu0 %v372
    %438 = vmatprep.subr.bf16.mxu0 %v375
    %439 = vmatpush1.bf16.msra.mxu0 %v374
    %440 = vmatprep.subr.bf16.mxu0 %v377
    %441 = vmatpush1.bf16.msra.mxu0 %v376
    %442 = vmatprep.subr.bf16.mxu0 %v379
    %443 = vmatpush1.bf16.msra.mxu0 %v378
    %444 = vmatprep.subr.bf16.mxu0 %v381
    %445 = vmatpush1.bf16.msra.mxu0 %v380
    %446 = vmatprep.subr.bf16.mxu0 %v383
    %447 = vmatpush1.bf16.msra.mxu0 %v382
    %448 = vmatprep.subr.bf16.mxu0 %v385
    %449 = vmatpush1.bf16.msra.mxu0 %v384
    %450 = vmatprep.subr.bf16.mxu0 %v387
    %451 = vmatpush1.bf16.msra.mxu0 %v386
    %452 = vmatprep.subr.bf16.mxu0 %v389
    %453 = vmatpush1.bf16.msra.mxu0 %v388
    %454 = vmatprep.subr.bf16.mxu0 %v391
    %455 = vmatpush1.bf16.msra.mxu0 %v390
    %456 = vmatprep.subr.bf16.mxu0 %v393
    %457 = vmatpush1.bf16.msra.mxu0 %v392
    %458 = vmatprep.mubr.bf16.mxu0 %v221
    %459 = vmatmul.mubr.bf16.gmra.mrb[0].mxu0 %v220
    %v460 = vpop.f32.mrb[0].mxu0
    %v461 = vadd.f32 %v259, %v460
    %v462 = vpop.f32.mrb[0].mxu0
    %v463 = vadd.f32 %v263, %v462
    %v464 = vpop.f32.mrb[0].mxu0
    %v465 = vpop.f32.mrb[0].mxu0
    %466 = vdwg.mxu0
    %v467 = vmax.f32 %v461, 0.0
    %v468 = vmax.f32 %v463, 0.0
    %v469 = vld [vmem:[%s5] sm:$0x3]
    %v471 = vlaneseq
    %v472 = vshrl.u32 %v471, 7
    %v473 = vsub.s32 0, %v472
    %v474 = vrot.slane %v469, %v473
    %v475 = vlaneseq
    %v476 = vshrl.u32 %v475, 7
    %v477 = vsub.s32 1, %v476
    %v478 = vrot.slane %v469, %v477
    %v481 = vmul.f32 %v467, %v474
    %v482 = vmul.f32 %v468, %v478
    %v483 = vadd.f32 %v481, %v482
    %484 = vadd.xlane.f32.xlu0 %v483
    %v485 = vpop.xlane.xlu0 %484
    %s486 = sld [smem:[#allocation2]]
    %v487 = vstv %s486
    %v488 = vadd.f32 %v485, %v487
    %vm489 = vcmask 7168
    %490 = vst.msk [vmem:[%s7] sm:$0xff] %vm489, %v488
    // Predicated region
    $region42: #{tpu_custom_call.1} parent=1 // pred_check
      _
    $region43: #{tpu_custom_call.1} parent=1 // pred_check_branch
      %492 = sbr.rel (0) target = $region45
    $region44: #{tpu_custom_call.1} parent=1 // pred_region
      _
    $region45: #{tpu_custom_call.1} parent=1 // pred_fallthru
      _
    // Predicated region
    $region46: #{tpu_custom_call.1} parent=1 // pred_check
      _
    $region47: #{tpu_custom_call.1} parent=1 // pred_check_branch
      %494 = sbr.rel (0) target = $region49
    $region48: #{tpu_custom_call.1} parent=1 // pred_region
      _
    $region49: #{tpu_custom_call.1} parent=1 // pred_fallthru
      _
    %495 = vsyncpa [#allocation4], 1
    %496 = vsyncpa [#allocation6], 1

</llo_original>
